<compile_context>
chip_gen: v7x
topology: tpu7x:2x2x1
jax: 0.10.0
libtpu: 0.0.40
codegen_flags: <defaults>
</compile_context>

<pallas_src>
import jax
import jax.numpy as jnp
from jax import lax
from jax.experimental import pallas as pl
from jax.experimental.pallas import tpu as pltpu

IGNORE = 255
EPS = 1e-7          # self.eps used for the clamp
GAMMA = 1.0
TP_MAX = 2048       # pixel-tile width on the lane axis (multiple of 128)


def _apply_raw_target_mutations(t):
    """Reproduce the eight sequential in-place shifts done on the aliased target."""
    t = t.at[:, :-1, :].set(t[:, 1:, :])      # target_left
    t = t.at[:, 1:, :].set(t[:, :-1, :])      # target_right
    t = t.at[:, :, 1:].set(t[:, :, :-1])      # target_up
    t = t.at[:, :, :-1].set(t[:, :, 1:])      # target_down
    t = t.at[:, :-1, 1:].set(t[:, 1:, :-1])   # target_left2
    t = t.at[:, 1:, 1:].set(t[:, :-1, :-1])   # target_right2
    t = t.at[:, 1:, :-1].set(t[:, :-1, 1:])   # target_up2
    t = t.at[:, :-1, :-1].set(t[:, 1:, 1:])   # target_down2
    return t


def _make_kernel(C, HW, TP):
    def kernel(x_ref, t_ref, num_ref, den_ref):
        j = pl.program_id(1)

        @pl.when(j == 0)
        def _():
            num_ref[...] = jnp.zeros_like(num_ref)
            den_ref[...] = jnp.zeros_like(den_ref)

        logits = x_ref[0].astype(jnp.float32)               # (C, TP)
        tgt = t_ref[0]                                      # (1, TP) int32

        # validity: real pixel (ragged tail of last tile) and not the ignore index
        col = j * TP + lax.broadcasted_iota(jnp.int32, (1, TP), 1)
        valid = jnp.logical_and(tgt != IGNORE, col < HW)    # (1, TP)

        # softmax over the class (sublane) axis; only the target prob is materialized
        m = jnp.max(logits, axis=0, keepdims=True)          # (1, TP)
        e = jnp.exp(logits - m)                             # (C, TP)
        sum_e = jnp.sum(e, axis=0, keepdims=True)           # (1, TP)
        row = lax.broadcasted_iota(jnp.int32, (C, TP), 0)
        e_t = jnp.max(jnp.where(row == tgt, e, 0.0),
                      axis=0, keepdims=True)                # (1, TP)
        p_t = e_t / sum_e                                   # per-pixel divide only

        p_t = jnp.clip(p_t, EPS, 1.0 - EPS)
        if GAMMA == 1.0:
            modulator = 1.0 - p_t
        else:
            modulator = jnp.power(1.0 - p_t, GAMMA)
        focal = -modulator * jnp.log(p_t)                   # (1, TP)

        # masked partial sums (select, not multiply, so garbage lanes can't inject NaN)
        num_ref[...] += jnp.sum(jnp.where(valid, focal, 0.0))
        den_ref[...] += jnp.sum(jnp.where(valid, 1.0, 0.0))

    return kernel


def static_loss(x, target, num_classes=11):
    """x: (B, C, H, W) float, target: (B, H, W) int.  Returns the scalar loss."""
    B, C, H, W = x.shape
    assert C == num_classes
    HW = H * W

    # pure reshape, no transpose: classes on sublanes, pixels on lanes
    logits = x.reshape(B, C, HW).astype(jnp.float32)

    t = target.astype(jnp.int32)
    if num_classes < 19:          # self.raw
        t = _apply_raw_target_mutations(t)
    t = t.reshape(B, 1, HW)

    # pixel-tile width: full dim when small (always a legal last-dim block),
    # otherwise a multiple of 128 with the ragged tail masked in-kernel.
    TP = HW if HW <= TP_MAX else TP_MAX
    n_tiles = pl.cdiv(HW, TP)

    num_parts, den_parts = pl.pallas_call(
        _make_kernel(C, HW, TP),
        out_shape=(jax.ShapeDtypeStruct((B, 1, 1), jnp.float32),
                   jax.ShapeDtypeStruct((B, 1, 1), jnp.float32)),
        grid=(B, n_tiles),
        in_specs=[
            pl.BlockSpec((1, C, TP), lambda b, j: (b, 0, j)),
            pl.BlockSpec((1, 1, TP), lambda b, j: (b, 0, j)),
        ],
        out_specs=[
            pl.BlockSpec((1, 1, 1), lambda b, j: (b, 0, 0)),
            pl.BlockSpec((1, 1, 1), lambda b, j: (b, 0, 0)),
        ],
        compiler_params=pltpu.CompilerParams(
            dimension_semantics=("parallel", "arbitrary")),
    )(logits, t)

    # Combine per-batch partials (also merges the two v7x TensorCores' halves).
    # NOTE: den==0 (all pixels ignored) yields NaN, matching the PyTorch reference.
    return jnp.sum(num_parts) / jnp.sum(den_parts)


def static_loss_ref(x, target, num_classes=11):
    """Pure-JAX reference of the same (aliased) PyTorch semantics."""
    B, C, H, W = x.shape
    logits = jnp.transpose(x, (0, 2, 3, 1)).reshape(-1, C).astype(jnp.float32)
    t = target.astype(jnp.int32)
    if num_classes < 19:
        t = _apply_raw_target_mutations(t)
    tf = t.reshape(-1)
    valid = tf != IGNORE
    probs = jax.nn.softmax(logits, axis=1)
    oh = jax.nn.one_hot(tf, C, dtype=jnp.float32)
    p = jnp.max(probs * oh, axis=1)
    p = jnp.clip(p, EPS, 1.0 - EPS)
    per_pix = -(1.0 - p) * jnp.log(p)
    return jnp.sum(per_pix * valid) / jnp.sum(valid.astype(jnp.float32))


if __name__ == "__main__":
    # Test 1: mirrors the PyTorch spec: a = rand(1, 11, 3, 3); b = [1,2,3,...].view(1,3,3)
    key = jax.random.PRNGKey(0)
    a = jax.random.uniform(key, (1, 11, 3, 3), dtype=jnp.float32)
    b = jnp.array([1, 2, 3, 1, 2, 3, 1, 2, 3], dtype=jnp.int32).reshape(1, 3, 3)

    loss = jax.block_until_ready(static_loss(a, b, num_classes=11))
    ref = jax.block_until_ready(static_loss_ref(a, b, num_classes=11))
    assert jnp.isfinite(loss), "loss is not finite"
    assert jnp.allclose(loss, ref, rtol=1e-5, atol=1e-6), (loss, ref)

    # Test 2: exercises multi-tile pipelining, the ragged last tile and ignore masking
    k1, k2, k3 = jax.random.split(jax.random.PRNGKey(0), 3)
    B, C, H, W = 2, 11, 68, 68            # HW = 4624 -> 3 pixel tiles, ragged tail
    x2 = jax.random.normal(k1, (B, C, H, W), dtype=jnp.float32)
    t2 = jax.random.randint(k2, (B, H, W), 0, C, dtype=jnp.int32)
    t2 = jnp.where(jax.random.bernoulli(k3, 0.1, (B, H, W)), IGNORE, t2)

    loss2 = jax.block_until_ready(static_loss(x2, t2, num_classes=11))
    ref2 = jax.block_until_ready(static_loss_ref(x2, t2, num_classes=11))
    assert jnp.isfinite(loss2), "loss2 is not finite"
    assert jnp.allclose(loss2, ref2, rtol=1e-4, atol=1e-5), (loss2, ref2)

    print("KERNEL_OK")
</pallas_src>

<mosaic_0001>
module attributes {stable_mosaic.version = 11 : i64} {
  func.func @kernel(%arg0: i32, %arg1: i32, %arg2: memref<1x11x9xf32, #tpu.memory_space<vmem>>, %arg3: memref<1x1x9xi32, #tpu.memory_space<vmem>>, %arg4: memref<1x1x1xf32, #tpu.memory_space<vmem>>, %arg5: memref<1x1x1xf32, #tpu.memory_space<vmem>>) attributes {dimension_semantics = [#tpu.dimension_semantics<parallel>, #tpu.dimension_semantics<arbitrary>], iteration_bounds = array<i64: 1, 1>, scalar_prefetch = 0 : i64, scratch_operands = 0 : i64, tpu.core_type = #tpu.core_type<tc>, window_params = [{transform_indices = @transform_0, window_bounds = array<i64: 1, 11, 9>}, {transform_indices = @transform_1, window_bounds = array<i64: 1, 1, 9>}, {transform_indices = @transform_2, window_bounds = array<i64: 1, 1, 1>}, {transform_indices = @transform_3, window_bounds = array<i64: 1, 1, 1>}]} {
    %c0_i32 = arith.constant 0 : i32
    %0 = arith.cmpi eq, %arg1, %c0_i32 : i32
    %1 = arith.extui %0 : i1 to i32
    %c0_i32_0 = arith.constant 0 : i32
    %2 = arith.cmpi ne, %1, %c0_i32_0 : i32
    scf.if %2 {
      %cst_31 = arith.constant 0.000000e+00 : f32
      %62 = vector.broadcast %cst_31 : f32 to vector<1x1x1xf32>
      %c0_32 = arith.constant 0 : index
      %c0_33 = arith.constant 0 : index
      %c0_34 = arith.constant 0 : index
      %63 = vector.load %arg4[%c0_32, %c0_33, %c0_34] : memref<1x1x1xf32, #tpu.memory_space<vmem>>, vector<1x1x1xf32>
      tpu.vector_store %arg4[%c0_32, %c0_33, %c0_34], %62 {strides = array<i32>} : memref<1x1x1xf32, #tpu.memory_space<vmem>>, vector<1x1x1xf32>,
      %cst_35 = arith.constant 0.000000e+00 : f32
      %64 = vector.broadcast %cst_35 : f32 to vector<1x1x1xf32>
      %c0_36 = arith.constant 0 : index
      %c0_37 = arith.constant 0 : index
      %c0_38 = arith.constant 0 : index
      %65 = vector.load %arg5[%c0_36, %c0_37, %c0_38] : memref<1x1x1xf32, #tpu.memory_space<vmem>>, vector<1x1x1xf32>
      tpu.vector_store %arg5[%c0_36, %c0_37, %c0_38], %64 {strides = array<i32>} : memref<1x1x1xf32, #tpu.memory_space<vmem>>, vector<1x1x1xf32>,
    } else {
    }
    %c0 = arith.constant 0 : index
    %c0_1 = arith.constant 0 : index
    %c0_2 = arith.constant 0 : index
    %3 = vector.load %arg2[%c0, %c0_1, %c0_2] : memref<1x11x9xf32, #tpu.memory_space<vmem>>, vector<1x11x9xf32>
    %4 = vector.shape_cast %3 : vector<1x11x9xf32> to vector<11x9xf32>
    %c0_3 = arith.constant 0 : index
    %c0_4 = arith.constant 0 : index
    %c0_5 = arith.constant 0 : index
    %5 = vector.load %arg3[%c0_3, %c0_4, %c0_5] : memref<1x1x9xi32, #tpu.memory_space<vmem>>, vector<1x1x9xi32>
    %6 = vector.shape_cast %5 : vector<1x1x9xi32> to vector<1x9xi32>
    %c9_i32 = arith.constant 9 : i32
    %7 = arith.muli %arg1, %c9_i32 : i32
    %8 = tpu.iota {dimensions = array<i32: 1>} : vector<1x9xi32>
    %9 = vector.broadcast %7 : i32 to vector<1x9xi32>
    %10 = arith.addi %9, %8 : vector<1x9xi32>
    %c255_i32 = arith.constant 255 : i32
    %11 = vector.broadcast %c255_i32 : i32 to vector<1x9xi32>
    %12 = arith.cmpi ne, %6, %11 : vector<1x9xi32>
    %c9_i32_6 = arith.constant 9 : i32
    %13 = vector.broadcast %c9_i32_6 : i32 to vector<1x9xi32>
    %14 = arith.cmpi slt, %10, %13 : vector<1x9xi32>
    %15 = arith.andi %12, %14 : vector<1x9xi1>
    %cst = arith.constant dense<0xFF800000> : vector<9xf32>
    %16 = vector.multi_reduction <maximumf>, %4, %cst [0] : vector<11x9xf32> to vector<9xf32>
    %17 = vector.shape_cast %16 : vector<9xf32> to vector<1x9xf32>
    %18 = vector.broadcast %17 : vector<1x9xf32> to vector<11x9xf32>
    %19 = arith.subf %4, %18 : vector<11x9xf32>
    %20 = math.exp %19 : vector<11x9xf32>
    %cst_7 = arith.constant dense<0.000000e+00> : vector<9xf32>
    %21 = vector.multi_reduction <add>, %20, %cst_7 [0] : vector<11x9xf32> to vector<9xf32>
    %22 = vector.shape_cast %21 : vector<9xf32> to vector<1x9xf32>
    %23 = tpu.iota {dimensions = array<i32: 0>} : vector<11x9xi32>
    %24 = vector.broadcast %6 : vector<1x9xi32> to vector<11x9xi32>
    %25 = arith.cmpi eq, %23, %24 : vector<11x9xi32>
    %cst_8 = arith.constant 0.000000e+00 : f32
    %26 = vector.broadcast %cst_8 : f32 to vector<11x9xf32>
    %27 = arith.select %25, %20, %26 : vector<11x9xi1>, vector<11x9xf32>
    %cst_9 = arith.constant dense<0xFF800000> : vector<9xf32>
    %28 = vector.multi_reduction <maximumf>, %27, %cst_9 [0] : vector<11x9xf32> to vector<9xf32>
    %29 = vector.shape_cast %28 : vector<9xf32> to vector<1x9xf32>
    %30 = arith.divf %29, %22 : vector<1x9xf32>
    %cst_10 = arith.constant 1.000000e-07 : f32
    %cst_11 = arith.constant 0.99999988 : f32
    %31 = vector.broadcast %cst_10 : f32 to vector<1x9xf32>
    %32 = arith.maximumf %31, %30 : vector<1x9xf32>
    %33 = vector.broadcast %cst_11 : f32 to vector<1x9xf32>
    %34 = arith.minimumf %33, %32 : vector<1x9xf32>
    %cst_12 = arith.constant 1.000000e+00 : f32
    %35 = vector.broadcast %cst_12 : f32 to vector<1x9xf32>
    %36 = arith.subf %35, %34 : vector<1x9xf32>
    %cst_13 = arith.constant 0.000000e+00 : f32
    %37 = vector.broadcast %cst_13 : f32 to vector<1x9xf32>
    %38 = arith.subf %37, %36 : vector<1x9xf32>
    %39 = math.log %34 : vector<1x9xf32>
    %40 = arith.mulf %38, %39 : vector<1x9xf32>
    %c0_14 = arith.constant 0 : index
    %c0_15 = arith.constant 0 : index
    %c0_16 = arith.constant 0 : index
    %41 = vector.load %arg4[%c0_14, %c0_15, %c0_16] : memref<1x1x1xf32, #tpu.memory_space<vmem>>, vector<1x1x1xf32>
    %cst_17 = arith.constant 0.000000e+00 : f32
    %42 = vector.broadcast %cst_17 : f32 to vector<1x9xf32>
    %43 = arith.select %15, %40, %42 : vector<1x9xi1>, vector<1x9xf32>
    %44 = vector.shape_cast %43 : vector<1x9xf32> to vector<1x1x9xf32>
    %cst_18 = arith.constant dense<0.000000e+00> : vector<1xf32>
    %45 = vector.multi_reduction <add>, %44, %cst_18 [1, 2] : vector<1x1x9xf32> to vector<1xf32>
    %46 = vector.shape_cast %45 : vector<1xf32> to vector<1x1x1xf32>
    %47 = vector.extract %46[0, 0, 0] : f32 from vector<1x1x1xf32>
    %48 = vector.broadcast %47 : f32 to vector<1x1x1xf32>
    %49 = arith.addf %41, %48 : vector<1x1x1xf32>
    %c0_19 = arith.constant 0 : index
    %c0_20 = arith.constant 0 : index
    %c0_21 = arith.constant 0 : index
    %50 = vector.load %arg4[%c0_19, %c0_20, %c0_21] : memref<1x1x1xf32, #tpu.memory_space<vmem>>, vector<1x1x1xf32>
    tpu.vector_store %arg4[%c0_19, %c0_20, %c0_21], %49 {strides = array<i32>} : memref<1x1x1xf32, #tpu.memory_space<vmem>>, vector<1x1x1xf32>,
    %c0_22 = arith.constant 0 : index
    %c0_23 = arith.constant 0 : index
    %c0_24 = arith.constant 0 : index
    %51 = vector.load %arg5[%c0_22, %c0_23, %c0_24] : memref<1x1x1xf32, #tpu.memory_space<vmem>>, vector<1x1x1xf32>
    %cst_25 = arith.constant 1.000000e+00 : f32
    %cst_26 = arith.constant 0.000000e+00 : f32
    %52 = vector.broadcast %cst_25 : f32 to vector<1x9xf32>
    %53 = vector.broadcast %cst_26 : f32 to vector<1x9xf32>
    %54 = arith.select %15, %52, %53 : vector<1x9xi1>, vector<1x9xf32>
    %55 = vector.shape_cast %54 : vector<1x9xf32> to vector<1x1x9xf32>
    %cst_27 = arith.constant dense<0.000000e+00> : vector<1xf32>
    %56 = vector.multi_reduction <add>, %55, %cst_27 [1, 2] : vector<1x1x9xf32> to vector<1xf32>
    %57 = vector.shape_cast %56 : vector<1xf32> to vector<1x1x1xf32>
    %58 = vector.extract %57[0, 0, 0] : f32 from vector<1x1x1xf32>
    %59 = vector.broadcast %58 : f32 to vector<1x1x1xf32>
    %60 = arith.addf %51, %59 : vector<1x1x1xf32>
    %c0_28 = arith.constant 0 : index
    %c0_29 = arith.constant 0 : index
    %c0_30 = arith.constant 0 : index
    %61 = vector.load %arg5[%c0_28, %c0_29, %c0_30] : memref<1x1x1xf32, #tpu.memory_space<vmem>>, vector<1x1x1xf32>
    tpu.vector_store %arg5[%c0_28, %c0_29, %c0_30], %60 {strides = array<i32>} : memref<1x1x1xf32, #tpu.memory_space<vmem>>, vector<1x1x1xf32>,
    return
  }
  func.func @transform_0(%arg0: i32, %arg1: i32) -> (i32, i32, i32) {
    %c0_i32 = arith.constant 0 : i32
    %c0_i32_0 = arith.constant 0 : i32
    return %arg0, %c0_i32, %arg1 : i32, i32, i32
  }
  func.func @transform_1(%arg0: i32, %arg1: i32) -> (i32, i32, i32) {
    %c0_i32 = arith.constant 0 : i32
    %c0_i32_0 = arith.constant 0 : i32
    return %arg0, %c0_i32, %arg1 : i32, i32, i32
  }
  func.func @transform_2(%arg0: i32, %arg1: i32) -> (i32, i32, i32) {
    %c0_i32 = arith.constant 0 : i32
    %c0_i32_0 = arith.constant 0 : i32
    %c0_i32_1 = arith.constant 0 : i32
    return %arg0, %c0_i32, %c0_i32_0 : i32, i32, i32
  }
  func.func @transform_3(%arg0: i32, %arg1: i32) -> (i32, i32, i32) {
    %c0_i32 = arith.constant 0 : i32
    %c0_i32_0 = arith.constant 0 : i32
    %c0_i32_1 = arith.constant 0 : i32
    return %arg0, %c0_i32, %c0_i32_0 : i32, i32, i32
  }
}

</mosaic_0001>

<llo_original>
// kernel: tpu_custom_call.1
$region0: #{tpu_custom_call.1}
  #allocation0 [shape = 'u32[]', space=smem, size = 0x4, offset = 0x4, fixed_abs, tag = 'smem constant byte address 0x4 - core index']
  #allocation1 [shape = 'u32[144,128]{1,0:T(1,128)}', space=vmem, size = 0x12000, scoped, tag = 'internal scratch']
  %s0 = inlined_call_operand.vmem [shape: f32[1,11,9], index: 0, kind: input, shape index: {}]
  %s1 = inlined_call_operand.vmem [shape: s32[1,1,9], index: 1, kind: input, shape index: {}]
  %s2 = inlined_call_operand.hbm [shape: f32[1,1,1], index: 2, kind: output, shape index: {0}]
  %s3 = inlined_call_operand.hbm [shape: f32[1,1,1], index: 3, kind: output, shape index: {1}]
  %4 = xla_tuple %s2, %s3
  %s5 = sld [smem:[#allocation0]]
  $region30: #{tpu_custom_call.1} parent=0
    _
  %s7 = ssub.s32 1, %s5
  %s8 = scalar_select 0, %s7, %s5
  $region1: #{tpu_custom_call.1} parent=0
    #allocation2 [shape = 'u8[512]{0}', space=vmem, size = 0x400, scoped, tag = 'output window, operand 0, single buffered']
    #allocation3 [shape = 's32[1]{0}', space=sflag, size = 0x4, scoped, tag = 'scoped memory for tpu_custom_call.1']
    #allocation4 [shape = 'u8[512]{0}', space=vmem, size = 0x400, scoped, tag = 'output window, operand 1, single buffered']
    #allocation5 [shape = 's32[1]{0}', space=sflag, size = 0x4, scoped, tag = 'scoped memory for tpu_custom_call.1']
    %9 = vsyncpa [#allocation3], 0
    %10 = vsyncpa [#allocation5], 0
    // Predicated region
    $region2: #{tpu_custom_call.1} parent=1 // pred_check
      _
    $region3: #{tpu_custom_call.1} parent=1 // pred_check_branch
      %12 = sbr.rel (0) target = $region5
    $region4: #{tpu_custom_call.1} parent=1 // pred_region
      _
    $region5: #{tpu_custom_call.1} parent=1 // pred_fallthru
      _
    // Predicated region
    $region6: #{tpu_custom_call.1} parent=1 // pred_check
      _
    $region7: #{tpu_custom_call.1} parent=1 // pred_check_branch
      %14 = sbr.rel (0) target = $region9
    $region8: #{tpu_custom_call.1} parent=1 // pred_region
      _
    $region9: #{tpu_custom_call.1} parent=1 // pred_fallthru
      _
    %p15 = scmp.eq.s32.totalorder 0, 0
    // Predicated region
    $region10: #{tpu_custom_call.1} parent=1 // pred_check
      %p16 = pneg %p15
    $region11: #{tpu_custom_call.1} parent=1 // pred_check_branch
      %18 = sbr.rel (%p16) target = $region13
    $region12: #{tpu_custom_call.1} parent=1 // pred_region
      %vm19 = vcmask 0
      %20 = vst.msk [vmem:[#allocation2] sm:$0x1] %vm19, 0.0
      %21 = vst.msk [vmem:[#allocation4] sm:$0x1] %vm19, 0.0
    $region13: #{tpu_custom_call.1} parent=1 // pred_fallthru
      _
    %v22 = vld [vmem:[%s0] sm:$0xff]
    %v23 = vld [vmem:[%s0 + $0x8] sm:$0x7]
    %v24 = vld [vmem:[%s1] sm:$0x1]
    %s25 = smul.u32 0, 9
    %v26 = vlaneseq
    %v27 = vand.u32 %v26, 127
    %v28 = vstv %s25
    %v29 = vadd.s32 %v28, %v27
    %vm30 = vcmp.ne.s32.totalorder %v24, 255
    %vm31 = vcmp.lt.s32.totalorder %v29, 9
    %vm32 = vmand %vm30, %vm31
    %vm33 = vcmask 72704
    %v34 = vsel %vm33, %v22, -inf
    %vm35 = vcmask 67584
    %v36 = vsel %vm35, %v23, -inf
    %v37 = vmax.f32 %v34, %v36
    %v38 = vrot.slane %v37, 4
    %v39 = vmax.f32 %v37, %v38
    %v40 = vrot.slane %v39, 2
    %v41 = vmax.f32 %v39, %v40
    %v42 = vrot.slane %v41, 1
    %v43 = vmax.f32 %v41, %v42
    %v44 = vsub.f32 %v22, %v43
    %v45 = vsub.f32 %v23, %v43
    %v46 = vmul.f32 %v44, 1.442695
    %v47 = vpow.pop %v46
    %v48 = vmul.f32 %v45, 1.442695
    %v49 = vpow.pop %v48
    %v50 = vsel %vm33, %v47, 0.0
    %v51 = vsel %vm35, %v49, 0.0
    %v52 = vadd.f32 %v50, %v51
    %v53 = vrot.slane %v52, 4
    %v54 = vadd.f32 %v52, %v53
    %v55 = vrot.slane %v54, 2
    %v56 = vadd.f32 %v54, %v55
    %v57 = vrot.slane %v56, 1
    %v58 = vadd.f32 %v56, %v57
    %v59 = vlaneseq
    %v60 = vshrl.u32 %v59, 7
    %v61 = vadd.s32 %v60, 8
    %v62 = vlaneseq
    %v63 = vshrl.u32 %v62, 7
    %v64 = vsub.s32 0, %v63
    %v65 = vrot.slane %v24, %v64
    %vm66 = vcmp.eq.s32.totalorder %v60, %v65
    %vm67 = vcmp.eq.s32.totalorder %v61, %v65
    %v68 = vsel %vm66, %v47, 0.0
    %v69 = vsel %vm67, %v49, 0.0
    %v70 = vsel %vm33, %v68, -inf
    %v71 = vsel %vm35, %v69, -inf
    %v72 = vmax.f32 %v70, %v71
    %v73 = vrot.slane %v72, 4
    %v74 = vmax.f32 %v72, %v73
    %v75 = vrot.slane %v74, 2
    %v76 = vmax.f32 %v74, %v75
    %v77 = vrot.slane %v76, 1
    %v78 = vmax.f32 %v76, %v77
    %v79 = vrcp.pop %v58
    %v80 = vmul.f32 %v78, %v79
    %v81 = vmax.f32 %v80, 1e-07
    %v82 = vmin.f32 %v81, 0.9999999
    %v83 = vsub.f32 1.0, %v82
    %v84 = vsub.f32 0.0, %v83
    %v85 = vlog2.pop %v82
    %v86 = vmul.f32 %v85, 0.6931472
    %v87 = vmul.f32 %v84, %v86
    %v88 = vld [vmem:[#allocation2] sm:$0x1]
    %v89 = vsel %vm32, %v87, 0.0
    %vm90 = vcmask 65536
    %v91 = vsel %vm90, %v89, 0.0
    %92 = vadd.xlane.f32.xlu0 %v91
    %v93 = vpop.xlane.xlu0 %92
    %v94 = vrot.slane %v93, 4
    %v95 = vadd.f32 %v93, %v94
    %v96 = vrot.slane %v95, 2
    %v97 = vadd.f32 %v95, %v96
    %v98 = vrot.slane %v97, 1
    %v99 = vadd.f32 %v97, %v98
    %s100 = vtos %v99
    %v101 = vstv %s100
    %v102 = vadd.f32 %v88, %v101
    %vm103 = vcmask 0
    %104 = vst.msk [vmem:[#allocation2] sm:$0x1] %vm103, %v102
    %v105 = vld [vmem:[#allocation4] sm:$0x1]
    %v106 = vsel %vm32, 1.0, 0.0
    %v107 = vsel %vm90, %v106, 0.0
    %108 = vadd.xlane.f32.xlu0 %v107
    %v109 = vpop.xlane.xlu0 %108
    %v110 = vrot.slane %v109, 4
    %v111 = vadd.f32 %v109, %v110
    %v112 = vrot.slane %v111, 2
    %v113 = vadd.f32 %v111, %v112
    %v114 = vrot.slane %v113, 1
    %v115 = vadd.f32 %v113, %v114
    %s116 = vtos %v115
    %v117 = vstv %s116
    %v118 = vadd.f32 %v105, %v117
    %119 = vst.msk [vmem:[#allocation4] sm:$0x1] %vm103, %v118
    // Predicated region
    $region14: #{tpu_custom_call.1} parent=1 // pred_check
      _
    $region15: #{tpu_custom_call.1} parent=1 // pred_check_branch
      %121 = sbr.rel (0) target = $region17
    $region16: #{tpu_custom_call.1} parent=1 // pred_region
      %s123 = ssub.s32 16, 16
      %124 = vsyncadd [#allocation3], %s123
      %s126 = sshll.u32 [#allocation2], 4
      %s127 = int_to_ptr.vmem [resolvable:$true] %s126
      %129 = dma.vmem_to_hbm [thread:$0]  %s127, 16, %s2, [#allocation3]
    $region17: #{tpu_custom_call.1} parent=1 // pred_fallthru
      _
    // Predicated region
    $region18: #{tpu_custom_call.1} parent=1 // pred_check
      _
    $region19: #{tpu_custom_call.1} parent=1 // pred_check_branch
      %131 = sbr.rel (0) target = $region21
    $region20: #{tpu_custom_call.1} parent=1 // pred_region
      %s133 = ssub.s32 16, 16
      %134 = vsyncadd [#allocation5], %s133
      %s136 = sshll.u32 [#allocation4], 4
      %s137 = int_to_ptr.vmem [resolvable:$true] %s136
      %139 = dma.vmem_to_hbm [thread:$0]  %s137, 16, %s3, [#allocation5]
    $region21: #{tpu_custom_call.1} parent=1 // pred_fallthru
      _
    // Predicated region
    $region22: #{tpu_custom_call.1} parent=1 // pred_check
      _
    $region23: #{tpu_custom_call.1} parent=1 // pred_check_branch
      %141 = sbr.rel (0) target = $region25
    $region24: #{tpu_custom_call.1} parent=1 // pred_region
      %142 = dma.done [#allocation3], 16
    $region25: #{tpu_custom_call.1} parent=1 // pred_fallthru
      _
    // Predicated region
    $region26: #{tpu_custom_call.1} parent=1 // pred_check
      _
    $region27: #{tpu_custom_call.1} parent=1 // pred_check_branch
      %144 = sbr.rel (0) target = $region29
    $region28: #{tpu_custom_call.1} parent=1 // pred_region
      %145 = dma.done [#allocation5], 16
    $region29: #{tpu_custom_call.1} parent=1 // pred_fallthru
      _
    %146 = vsyncpa [#allocation3], 1
    %147 = vsyncpa [#allocation5], 1

</llo_original>
